<compile_context>
chip_gen: v6e
topology: v6e:2x2x1
jax: 0.10.0
libtpu: 0.0.40
codegen_flags: <defaults>
</compile_context>

<pallas_src>
import functools

import jax
import jax.numpy as jnp
from jax import lax
from jax.experimental import pallas as pl
from jax.experimental.pallas import tpu as pltpu

_LANE = 128
_SUBLANE = 8


def _round_up(n: int, m: int) -> int:
    return ((n + m - 1) // m) * m


def _pad2(a, rows: int, cols: int):
    return jnp.pad(a, ((0, rows - a.shape[0]), (0, cols - a.shape[1])))


def _ode_rk4_kernel(t_ref, xT_ref, w1T_ref, b1_ref, w2T_ref, b2_ref, oT_ref,
                    *, num_steps: int, use_38_rule: bool):
    """num_steps fixed RK4 steps of dy/dt = MLP(y), state kept batch-in-lane.

    t_ref   : SMEM (2,) f32          integration_time [t0, t1]
    xT_ref  : VMEM (Dp, TB)          batch tile of y^T (batch on the lane axis)
    w1T_ref : VMEM (Hp, Dp)          W1^T, resident across batch tiles
    b1_ref  : VMEM (Hp, 1)           b1 as a column vector
    w2T_ref : VMEM (Dp, Hp)          W2^T, resident
    b2_ref  : VMEM (Dp, 1)           b2 as a column vector
    oT_ref  : VMEM (Dp, TB)          y^T at t1
    """
    h = (t_ref[1] - t_ref[0]) / float(num_steps)

    w1T = w1T_ref[...]
    w2T = w2T_ref[...]
    b1 = b1_ref[...].astype(jnp.float32)   # (Hp, 1) — broadcast along lanes per use
    b2 = b2_ref[...].astype(jnp.float32)   # (Dp, 1)

    def f(y):
        # y: (Dp, TB).  Cast MXU inputs to the weight dtype (no-op for f32, bf16 path
        # for v6e/v7x); accumulation stays f32.
        hid = jnp.tanh(jnp.dot(w1T, y.astype(w1T.dtype),
                               preferred_element_type=jnp.float32) + b1)
        return jnp.dot(w2T, hid.astype(w2T.dtype),
                       preferred_element_type=jnp.float32) + b2

    def step_rk4(_, y):
        # Classical RK4 with a running accumulator: only y, acc, k, hid stay live.
        k = f(y)                      # k1
        acc = k
        k = f(y + (0.5 * h) * k)      # k2
        acc = acc + 2.0 * k
        k = f(y + (0.5 * h) * k)      # k3
        acc = acc + 2.0 * k
        k = f(y + h * k)              # k4
        return y + (h / 6.0) * (acc + k)

    def step_38(_, y):
        # torchdiffeq-style fixed-grid 'rk4' (3/8 rule); only partially reducible.
        k1 = f(y)
        k2 = f(y + (h / 3.0) * k1)
        k3 = f(y + h * (k2 - k1 / 3.0))
        acc = k1 + 3.0 * (k2 + k3)
        k4 = f(y + h * (k1 - k2 + k3))
        return y + (h / 8.0) * (acc + k4)

    step = step_38 if use_38_rule else step_rk4

    y0 = xT_ref[...].astype(jnp.float32)
    if num_steps == 1:
        y = step(0, y0)
    else:
        # Full unroll for short loops; partial unroll (4) beyond that so the scheduler
        # still co-issues MXU pushes / EUP tanh / VPU combines without code-size blowup.
        unroll = num_steps if num_steps <= 8 else 4
        y = lax.fori_loop(0, num_steps, step, y0, unroll=unroll)
    oT_ref[...] = y.astype(oT_ref.dtype)


def ode_block_forward(x, integration_time, w1, b1, w2, b2, *,
                      num_steps: int = 1,
                      tableau: str = "rk4",
                      compute_dtype=jnp.float32,
                      block_batch: int = 256):
    """Pallas ODEBlock forward: RK4 state at integration_time[1] (== odeint(...)[1]).

    x:(B,D)  w1:(D,H)  b1:(1,H)  w2:(H,D)  b2:(1,D)  integration_time:(2,)
    tableau: "rk4" (classical) or "rk4_38" (torchdiffeq fixed-grid rk4 variant).
    compute_dtype: dtype fed to the MXU (f32, or bf16 on v6e/v7x); accumulation is f32.
    block_batch: target batch-lane tile (rounded to a multiple of 128).
    """
    B, D = x.shape
    H = w1.shape[1]

    # Feature dims only need sublane (8) alignment in the transposed layout; the batch
    # (lane) axis is padded to a multiple of the tile.  Zero padding is exact for this
    # MLP ODE func (tanh(0)=0, padded weight rows/cols and biases are 0), and padded
    # batch lanes are independent junk columns that get sliced away.
    Dp = _round_up(D, _SUBLANE)
    Hp = _round_up(H, _SUBLANE)
    TB = max(_LANE, _round_up(min(block_batch, B), _LANE))
    Bp = _round_up(B, TB)

    xT = _pad2(x.T, Dp, Bp)                                  # (Dp, Bp) batch-in-lane
    w1T = _pad2(w1.T, Hp, Dp).astype(compute_dtype)          # (Hp, Dp)
    b1c = _pad2(b1.T, Hp, 1).astype(jnp.float32)             # (Hp, 1)
    w2T = _pad2(w2.T, Dp, Hp).astype(compute_dtype)          # (Dp, Hp)
    b2c = _pad2(b2.T, Dp, 1).astype(jnp.float32)             # (Dp, 1)
    it = integration_time.astype(jnp.float32)

    kernel = functools.partial(_ode_rk4_kernel,
                               num_steps=int(num_steps),
                               use_38_rule=(tableau == "rk4_38"))

    # VMEM budget at these sizes is tiny (weights + 2x double-buffered (Dp,TB) tiles
    # << default scoped limit).  For large D/H, raise vmem_limit_bytes in
    # CompilerParams or tile H; on v7x budget against 32 MiB scoped / 64 MiB physical.
    outT = pl.pallas_call(
        kernel,
        out_shape=jax.ShapeDtypeStruct((Dp, Bp), x.dtype),
        grid=(Bp // TB,),
        in_specs=[
            pl.BlockSpec(memory_space=pltpu.SMEM),           # integration_time (2,)
            pl.BlockSpec((Dp, TB), lambda i: (0, i)),        # y^T batch tile
            pl.BlockSpec((Hp, Dp), lambda i: (0, 0)),        # W1^T (resident)
            pl.BlockSpec((Hp, 1), lambda i: (0, 0)),         # b1 column (resident)
            pl.BlockSpec((Dp, Hp), lambda i: (0, 0)),        # W2^T (resident)
            pl.BlockSpec((Dp, 1), lambda i: (0, 0)),         # b2 column (resident)
        ],
        out_specs=pl.BlockSpec((Dp, TB), lambda i: (0, i)),
        compiler_params=pltpu.CompilerParams(
            dimension_semantics=("parallel",)),              # independent batch tiles
    )(it, xT, w1T, b1c, w2T, b2c)

    return outT[:D, :B].T


def _reference(x, integration_time, w1, b1, w2, b2, *, num_steps=1, tableau="rk4"):
    """Pure-JAX reference for fixed-step RK4 of the MLP ODE func."""
    h = (integration_time[1] - integration_time[0]) / num_steps

    def f(y):
        return jnp.tanh(y @ w1 + b1) @ w2 + b2

    y = x
    for _ in range(num_steps):
        k1 = f(y)
        if tableau == "rk4_38":
            k2 = f(y + (h / 3.0) * k1)
            k3 = f(y + h * (k2 - k1 / 3.0))
            k4 = f(y + h * (k1 - k2 + k3))
            y = y + (h / 8.0) * (k1 + 3.0 * k2 + 3.0 * k3 + k4)
        else:
            k2 = f(y + 0.5 * h * k1)
            k3 = f(y + 0.5 * h * k2)
            k4 = f(y + h * k3)
            y = y + (h / 6.0) * (k1 + 2.0 * k2 + 2.0 * k3 + k4)
    return y


if __name__ == "__main__":
    # State dim 32, hidden width 32 — consistent with the module's MLP odefunc.
    D, H = 32, 32

    key = jax.random.PRNGKey(0)
    k_x, k_w1, k_b1, k_w2, k_b2, k_x2 = jax.random.split(key, 6)

    w1 = 0.1 * jax.random.normal(k_w1, (D, H), dtype=jnp.float32)
    b1 = 0.1 * jax.random.normal(k_b1, (1, H), dtype=jnp.float32)
    w2 = 0.1 * jax.random.normal(k_w2, (H, D), dtype=jnp.float32)
    b2 = 0.1 * jax.random.normal(k_b2, (1, D), dtype=jnp.float32)
    integration_time = jnp.array([0.0, 1.0], dtype=jnp.float32)

    # 1) Small batch (32): collapses to a single 128-lane tile, grid=(1,), one RK4 step
    #    (matches the module's 2-point integration_time grid).
    B = 32
    x = jax.random.normal(k_x, (B, D), dtype=jnp.float32)
    out = jax.block_until_ready(
        ode_block_forward(x, integration_time, w1, b1, w2, b2, num_steps=1))
    ref = _reference(x, integration_time, w1, b1, w2, b2, num_steps=1)
    assert out.shape == (B, D)
    assert jnp.allclose(out, ref, atol=1e-5, rtol=1e-5), "mismatch (1-step rk4)"

    # 2) Larger batch (256) with 2 parallel 128-lane tiles (dual-TC friendly on v7x)
    #    and a 4-step RK4 loop fused inside the kernel.
    B2 = 256
    x2 = jax.random.normal(k_x2, (B2, D), dtype=jnp.float32)
    out4 = jax.block_until_ready(
        ode_block_forward(x2, integration_time, w1, b1, w2, b2,
                          num_steps=4, block_batch=128))
    ref4 = _reference(x2, integration_time, w1, b1, w2, b2, num_steps=4)
    assert out4.shape == (B2, D)
    assert jnp.allclose(out4, ref4, atol=1e-5, rtol=1e-5), "mismatch (4-step rk4)"

    # 3) torchdiffeq-style 3/8-rule tableau variant.
    out38 = jax.block_until_ready(
        ode_block_forward(x, integration_time, w1, b1, w2, b2,
                          num_steps=1, tableau="rk4_38"))
    ref38 = _reference(x, integration_time, w1, b1, w2, b2,
                       num_steps=1, tableau="rk4_38")
    assert jnp.allclose(out38, ref38, atol=1e-5, rtol=1e-5), "mismatch (3/8 rule)"

    # 4) bf16 MXU path (v6e/v7x), f32 accumulation — relaxed tolerance by design.
    outbf = jax.block_until_ready(
        ode_block_forward(x, integration_time, w1, b1, w2, b2,
                          num_steps=1, compute_dtype=jnp.bfloat16))
    assert jnp.allclose(outbf, ref, atol=5e-2, rtol=5e-2), "mismatch (bf16 MXU path)"

    print("KERNEL_OK")
</pallas_src>

<mosaic_0001>
module attributes {stable_mosaic.version = 11 : i64} {
  func.func @_ode_rk4_kernel(%arg0: i32, %arg1: memref<2xf32, #tpu.memory_space<smem>>, %arg2: memref<32x128xf32, #tpu.memory_space<vmem>>, %arg3: memref<32x32xf32, #tpu.memory_space<vmem>>, %arg4: memref<32x1xf32, #tpu.memory_space<vmem>>, %arg5: memref<32x32xf32, #tpu.memory_space<vmem>>, %arg6: memref<32x1xf32, #tpu.memory_space<vmem>>, %arg7: memref<32x128xf32, #tpu.memory_space<vmem>>) attributes {dimension_semantics = [#tpu.dimension_semantics<parallel>], iteration_bounds = array<i64: 1>, scalar_prefetch = 0 : i64, scratch_operands = 0 : i64, tpu.core_type = #tpu.core_type<tc>, window_params = [{transform_indices = @transform_0, window_bounds = array<i64: 2>}, {transform_indices = @transform_1, window_bounds = array<i64: 32, 128>}, {pipeline_mode = #tpu.pipeline_mode<synchronous>, transform_indices = @transform_2, window_bounds = array<i64: 32, 32>}, {pipeline_mode = #tpu.pipeline_mode<synchronous>, transform_indices = @transform_3, window_bounds = array<i64: 32, 1>}, {pipeline_mode = #tpu.pipeline_mode<synchronous>, transform_indices = @transform_4, window_bounds = array<i64: 32, 32>}, {pipeline_mode = #tpu.pipeline_mode<synchronous>, transform_indices = @transform_5, window_bounds = array<i64: 32, 1>}, {transform_indices = @transform_6, window_bounds = array<i64: 32, 128>}]} {
    %c1 = arith.constant 1 : index
    %0 = memref.load %arg1[%c1] : memref<2xf32, #tpu.memory_space<smem>>
    %c0 = arith.constant 0 : index
    %1 = memref.load %arg1[%c0] : memref<2xf32, #tpu.memory_space<smem>>
    %2 = arith.subf %0, %1 : f32
    %cst = arith.constant 1.000000e+00 : f32
    %3 = arith.divf %2, %cst : f32
    %c0_0 = arith.constant 0 : index
    %c0_1 = arith.constant 0 : index
    %4 = vector.load %arg3[%c0_0, %c0_1] : memref<32x32xf32, #tpu.memory_space<vmem>>, vector<32x32xf32>
    %c0_2 = arith.constant 0 : index
    %c0_3 = arith.constant 0 : index
    %5 = vector.load %arg5[%c0_2, %c0_3] : memref<32x32xf32, #tpu.memory_space<vmem>>, vector<32x32xf32>
    %c0_4 = arith.constant 0 : index
    %c0_5 = arith.constant 0 : index
    %6 = vector.load %arg4[%c0_4, %c0_5] : memref<32x1xf32, #tpu.memory_space<vmem>>, vector<32x1xf32>
    %c0_6 = arith.constant 0 : index
    %c0_7 = arith.constant 0 : index
    %7 = vector.load %arg6[%c0_6, %c0_7] : memref<32x1xf32, #tpu.memory_space<vmem>>, vector<32x1xf32>
    %c0_8 = arith.constant 0 : index
    %c0_9 = arith.constant 0 : index
    %8 = vector.load %arg2[%c0_8, %c0_9] : memref<32x128xf32, #tpu.memory_space<vmem>>, vector<32x128xf32>
    %cst_10 = arith.constant dense<0.000000e+00> : vector<32x128xf32>
    %9 = tpu.matmul %4, %8, %cst_10 {dimension_numbers = #tpu.dot_dimension_numbers<[1], [0], [0], [1], [0, 0, 1, 1], [], []>} : vector<32x32xf32>, vector<32x128xf32>, vector<32x128xf32> -> vector<32x128xf32>
    %10 = vector.broadcast %6 : vector<32x1xf32> to vector<32x128xf32>
    %11 = arith.addf %9, %10 : vector<32x128xf32>
    %12 = math.tanh %11 : vector<32x128xf32>
    %cst_11 = arith.constant dense<0.000000e+00> : vector<32x128xf32>
    %13 = tpu.matmul %5, %12, %cst_11 {dimension_numbers = #tpu.dot_dimension_numbers<[1], [0], [0], [1], [0, 0, 1, 1], [], []>} : vector<32x32xf32>, vector<32x128xf32>, vector<32x128xf32> -> vector<32x128xf32>
    %14 = vector.broadcast %7 : vector<32x1xf32> to vector<32x128xf32>
    %15 = arith.addf %13, %14 : vector<32x128xf32>
    %cst_12 = arith.constant 5.000000e-01 : f32
    %16 = arith.mulf %cst_12, %3 : f32
    %17 = vector.broadcast %16 : f32 to vector<32x128xf32>
    %18 = arith.mulf %17, %15 : vector<32x128xf32>
    %19 = arith.addf %8, %18 : vector<32x128xf32>
    %cst_13 = arith.constant dense<0.000000e+00> : vector<32x128xf32>
    %20 = tpu.matmul %4, %19, %cst_13 {dimension_numbers = #tpu.dot_dimension_numbers<[1], [0], [0], [1], [0, 0, 1, 1], [], []>} : vector<32x32xf32>, vector<32x128xf32>, vector<32x128xf32> -> vector<32x128xf32>
    %21 = vector.broadcast %6 : vector<32x1xf32> to vector<32x128xf32>
    %22 = arith.addf %20, %21 : vector<32x128xf32>
    %23 = math.tanh %22 : vector<32x128xf32>
    %cst_14 = arith.constant dense<0.000000e+00> : vector<32x128xf32>
    %24 = tpu.matmul %5, %23, %cst_14 {dimension_numbers = #tpu.dot_dimension_numbers<[1], [0], [0], [1], [0, 0, 1, 1], [], []>} : vector<32x32xf32>, vector<32x128xf32>, vector<32x128xf32> -> vector<32x128xf32>
    %25 = vector.broadcast %7 : vector<32x1xf32> to vector<32x128xf32>
    %26 = arith.addf %24, %25 : vector<32x128xf32>
    %cst_15 = arith.constant 2.000000e+00 : f32
    %27 = vector.broadcast %cst_15 : f32 to vector<32x128xf32>
    %28 = arith.mulf %27, %26 : vector<32x128xf32>
    %29 = arith.addf %15, %28 : vector<32x128xf32>
    %cst_16 = arith.constant 5.000000e-01 : f32
    %30 = arith.mulf %cst_16, %3 : f32
    %31 = vector.broadcast %30 : f32 to vector<32x128xf32>
    %32 = arith.mulf %31, %26 : vector<32x128xf32>
    %33 = arith.addf %8, %32 : vector<32x128xf32>
    %cst_17 = arith.constant dense<0.000000e+00> : vector<32x128xf32>
    %34 = tpu.matmul %4, %33, %cst_17 {dimension_numbers = #tpu.dot_dimension_numbers<[1], [0], [0], [1], [0, 0, 1, 1], [], []>} : vector<32x32xf32>, vector<32x128xf32>, vector<32x128xf32> -> vector<32x128xf32>
    %35 = vector.broadcast %6 : vector<32x1xf32> to vector<32x128xf32>
    %36 = arith.addf %34, %35 : vector<32x128xf32>
    %37 = math.tanh %36 : vector<32x128xf32>
    %cst_18 = arith.constant dense<0.000000e+00> : vector<32x128xf32>
    %38 = tpu.matmul %5, %37, %cst_18 {dimension_numbers = #tpu.dot_dimension_numbers<[1], [0], [0], [1], [0, 0, 1, 1], [], []>} : vector<32x32xf32>, vector<32x128xf32>, vector<32x128xf32> -> vector<32x128xf32>
    %39 = vector.broadcast %7 : vector<32x1xf32> to vector<32x128xf32>
    %40 = arith.addf %38, %39 : vector<32x128xf32>
    %cst_19 = arith.constant 2.000000e+00 : f32
    %41 = vector.broadcast %cst_19 : f32 to vector<32x128xf32>
    %42 = arith.mulf %41, %40 : vector<32x128xf32>
    %43 = arith.addf %29, %42 : vector<32x128xf32>
    %44 = vector.broadcast %3 : f32 to vector<32x128xf32>
    %45 = arith.mulf %44, %40 : vector<32x128xf32>
    %46 = arith.addf %8, %45 : vector<32x128xf32>
    %cst_20 = arith.constant dense<0.000000e+00> : vector<32x128xf32>
    %47 = tpu.matmul %4, %46, %cst_20 {dimension_numbers = #tpu.dot_dimension_numbers<[1], [0], [0], [1], [0, 0, 1, 1], [], []>} : vector<32x32xf32>, vector<32x128xf32>, vector<32x128xf32> -> vector<32x128xf32>
    %48 = vector.broadcast %6 : vector<32x1xf32> to vector<32x128xf32>
    %49 = arith.addf %47, %48 : vector<32x128xf32>
    %50 = math.tanh %49 : vector<32x128xf32>
    %cst_21 = arith.constant dense<0.000000e+00> : vector<32x128xf32>
    %51 = tpu.matmul %5, %50, %cst_21 {dimension_numbers = #tpu.dot_dimension_numbers<[1], [0], [0], [1], [0, 0, 1, 1], [], []>} : vector<32x32xf32>, vector<32x128xf32>, vector<32x128xf32> -> vector<32x128xf32>
    %52 = vector.broadcast %7 : vector<32x1xf32> to vector<32x128xf32>
    %53 = arith.addf %51, %52 : vector<32x128xf32>
    %cst_22 = arith.constant 6.000000e+00 : f32
    %54 = arith.divf %3, %cst_22 : f32
    %55 = arith.addf %43, %53 : vector<32x128xf32>
    %56 = vector.broadcast %54 : f32 to vector<32x128xf32>
    %57 = arith.mulf %56, %55 : vector<32x128xf32>
    %58 = arith.addf %8, %57 : vector<32x128xf32>
    %c0_23 = arith.constant 0 : index
    %c0_24 = arith.constant 0 : index
    %59 = vector.load %arg7[%c0_23, %c0_24] : memref<32x128xf32, #tpu.memory_space<vmem>>, vector<32x128xf32>
    tpu.vector_store %arg7[%c0_23, %c0_24], %58 {strides = array<i32>} : memref<32x128xf32, #tpu.memory_space<vmem>>, vector<32x128xf32>,
    return
  }
  func.func @transform_0(%arg0: i32) -> i32 {
    %c0_i32 = arith.constant 0 : i32
    %c0_i32_0 = arith.constant 0 : i32
    return %c0_i32 : i32
  }
  func.func @transform_1(%arg0: i32) -> (i32, i32) {
    %c0_i32 = arith.constant 0 : i32
    %c0_i32_0 = arith.constant 0 : i32
    return %c0_i32, %arg0 : i32, i32
  }
  func.func @transform_2(%arg0: i32) -> (i32, i32) {
    %c0_i32 = arith.constant 0 : i32
    %c0_i32_0 = arith.constant 0 : i32
    %c0_i32_1 = arith.constant 0 : i32
    return %c0_i32, %c0_i32_0 : i32, i32
  }
  func.func @transform_3(%arg0: i32) -> (i32, i32) {
    %c0_i32 = arith.constant 0 : i32
    %c0_i32_0 = arith.constant 0 : i32
    %c0_i32_1 = arith.constant 0 : i32
    return %c0_i32, %c0_i32_0 : i32, i32
  }
  func.func @transform_4(%arg0: i32) -> (i32, i32) {
    %c0_i32 = arith.constant 0 : i32
    %c0_i32_0 = arith.constant 0 : i32
    %c0_i32_1 = arith.constant 0 : i32
    return %c0_i32, %c0_i32_0 : i32, i32
  }
  func.func @transform_5(%arg0: i32) -> (i32, i32) {
    %c0_i32 = arith.constant 0 : i32
    %c0_i32_0 = arith.constant 0 : i32
    %c0_i32_1 = arith.constant 0 : i32
    return %c0_i32, %c0_i32_0 : i32, i32
  }
  func.func @transform_6(%arg0: i32) -> (i32, i32) {
    %c0_i32 = arith.constant 0 : i32
    %c0_i32_0 = arith.constant 0 : i32
    return %c0_i32, %arg0 : i32, i32
  }
}

</mosaic_0001>

<llo_original>
// kernel: tpu_custom_call.1
$region0: #{tpu_custom_call.1}
  #allocation0 [shape = 'u32[]', space=smem, size = 0x4, offset = 0x4, fixed_abs, tag = 'smem constant byte address 0x4 - core index']
  #allocation1 [shape = 'u32[144,128]{1,0:T(1,128)}', space=vmem, size = 0x12000, scoped, tag = 'internal scratch']
  %s0 = inlined_call_operand.vmem [shape: f32[2], index: 0, kind: input, shape index: {}]
  %s1 = inlined_call_operand.vmem [shape: f32[32,128], index: 1, kind: input, shape index: {}]
  %s2 = inlined_call_operand.vmem [shape: f32[32,32], index: 2, kind: input, shape index: {}]
  %s3 = inlined_call_operand.vmem [shape: f32[32,1], index: 3, kind: input, shape index: {}]
  %s4 = inlined_call_operand.hbm [shape: f32[32,32], index: 4, kind: input, shape index: {}]
  %s5 = inlined_call_operand.vmem [shape: f32[32,1], index: 5, kind: input, shape index: {}]
  %s6 = inlined_call_operand.hbm [shape: f32[32,128], index: 6, kind: output, shape index: {}]
  %s7 = sld [smem:[#allocation0]]
  $region42: #{tpu_custom_call.1} parent=0
    _
  %s9 = ssub.s32 1, %s7
  %s10 = scalar_select 0, %s9, %s7
  $region1: #{tpu_custom_call.1} parent=0
    #allocation2 [shape = 'u8[512]{0}', space=smem, size = 0x200, scoped, tag = 'input window, operand 0, single buffered']
    #allocation3 [shape = 's32[1]{0}', space=sflag, size = 0x4, scoped, tag = 'scoped memory for tpu_custom_call.1']
    #allocation4 [shape = 's32[1]{0}', space=sflag, size = 0x4, scoped, tag = 'scoped memory for tpu_custom_call.1']
    #allocation5 [shape = 's32[1]{0}', space=sflag, size = 0x4, scoped, tag = 'scoped memory for tpu_custom_call.1']
    #allocation6 [shape = 'u8[16384]{0}', space=vmem, size = 0x4000, scoped, tag = 'input window, operand 4, single buffered']
    #allocation7 [shape = 'u8[16384]{0}', space=vmem, size = 0x4000, scoped, tag = 'output window, operand 0, single buffered']
    %11 = vsyncpa [#allocation5], 0
    %12 = vsyncpa [#allocation3], 0
    %13 = vsyncpa [#allocation4], 0
    // Predicated region
    $region2: #{tpu_custom_call.1} parent=1 // pred_check
      _
    $region3: #{tpu_custom_call.1} parent=1 // pred_check_branch
      %15 = sbr.rel (0) target = $region5
    $region4: #{tpu_custom_call.1} parent=1 // pred_region
      %s17 = ssub.s32 16, 16
      %18 = vsyncadd [#allocation5], %s17
      %s20 = sshll.u32 %s0, 4
      %s21 = int_to_ptr.vmem [resolvable:$true] %s20
      %23 = dma.vmem_to_smem %s21, 16, [#allocation2], [#allocation5]
    $region5: #{tpu_custom_call.1} parent=1 // pred_fallthru
      _
    // Predicated region
    $region6: #{tpu_custom_call.1} parent=1 // pred_check
      _
    $region7: #{tpu_custom_call.1} parent=1 // pred_check_branch
      %25 = sbr.rel (0) target = $region9
    $region8: #{tpu_custom_call.1} parent=1 // pred_region
      _
    $region9: #{tpu_custom_call.1} parent=1 // pred_fallthru
      _
    // Predicated region
    $region10: #{tpu_custom_call.1} parent=1 // pred_check
      _
    $region11: #{tpu_custom_call.1} parent=1 // pred_check_branch
      %27 = sbr.rel (0) target = $region13
    $region12: #{tpu_custom_call.1} parent=1 // pred_region
      _
    $region13: #{tpu_custom_call.1} parent=1 // pred_fallthru
      _
    // Predicated region
    $region14: #{tpu_custom_call.1} parent=1 // pred_check
      _
    $region15: #{tpu_custom_call.1} parent=1 // pred_check_branch
      %29 = sbr.rel (0) target = $region17
    $region16: #{tpu_custom_call.1} parent=1 // pred_region
      _
    $region17: #{tpu_custom_call.1} parent=1 // pred_fallthru
      _
    // Predicated region
    $region18: #{tpu_custom_call.1} parent=1 // pred_check
      _
    $region19: #{tpu_custom_call.1} parent=1 // pred_check_branch
      %31 = sbr.rel (0) target = $region21
    $region20: #{tpu_custom_call.1} parent=1 // pred_region
      %s33 = ssub.s32 512, 512
      %34 = vsyncadd [#allocation3], %s33
      %s35 = sshll.u32 [#allocation6], 4
      %s36 = int_to_ptr.vmem [resolvable:$true] %s35
      %41 = dma.hbm_to_vmem [thread:$0]  %s4, 512, %s36, [#allocation3], 128, 128, 8
    $region21: #{tpu_custom_call.1} parent=1 // pred_fallthru
      _
    // Predicated region
    $region22: #{tpu_custom_call.1} parent=1 // pred_check
      _
    $region23: #{tpu_custom_call.1} parent=1 // pred_check_branch
      %43 = sbr.rel (0) target = $region25
    $region24: #{tpu_custom_call.1} parent=1 // pred_region
      _
    $region25: #{tpu_custom_call.1} parent=1 // pred_fallthru
      _
    // Predicated region
    $region26: #{tpu_custom_call.1} parent=1 // pred_check
      _
    $region27: #{tpu_custom_call.1} parent=1 // pred_check_branch
      %45 = sbr.rel (0) target = $region29
    $region28: #{tpu_custom_call.1} parent=1 // pred_region
      %46 = dma.done [#allocation5], 16
    $region29: #{tpu_custom_call.1} parent=1 // pred_fallthru
      _
    // Predicated region
    $region30: #{tpu_custom_call.1} parent=1 // pred_check
      _
    $region31: #{tpu_custom_call.1} parent=1 // pred_check_branch
      %48 = sbr.rel (0) target = $region33
    $region32: #{tpu_custom_call.1} parent=1 // pred_region
      %49 = dma.done [#allocation3], 512
    $region33: #{tpu_custom_call.1} parent=1 // pred_fallthru
      _
    %50 = sfence
    %s51 = sld [smem:[#allocation2 + $0x1]]
    %s52 = sld [smem:[#allocation2]]
    %s53 = ssub.f32 %s51, %s52
    %v54 = vld [vmem:[%s2] sm:$0xff]
    %v55 = vld [vmem:[%s2 + $0x8] sm:$0xff]
    %v56 = vld [vmem:[%s2 + $0x10] sm:$0xff]
    %v57 = vld [vmem:[%s2 + $0x18] sm:$0xff]
    %v58 = vld [vmem:[#allocation6] sm:$0xff]
    %v59 = vld [vmem:[#allocation6 + $0x8] sm:$0xff]
    %v60 = vld [vmem:[#allocation6 + $0x10] sm:$0xff]
    %v61 = vld [vmem:[#allocation6 + $0x18] sm:$0xff]
    %v62 = vld [vmem:[%s3] sm:$0xff]
    %v63 = vld [vmem:[%s3 + $0x8] sm:$0xff]
    %v64 = vld [vmem:[%s3 + $0x10] sm:$0xff]
    %v65 = vld [vmem:[%s3 + $0x18] sm:$0xff]
    %v66 = vld [vmem:[%s5] sm:$0xff]
    %v67 = vld [vmem:[%s5 + $0x8] sm:$0xff]
    %v68 = vld [vmem:[%s5 + $0x10] sm:$0xff]
    %v69 = vld [vmem:[%s5 + $0x18] sm:$0xff]
    %v70 = vld [vmem:[%s1] sm:$0xff]
    %v71 = vld [vmem:[%s1 + $0x8] sm:$0xff]
    %v72 = vld [vmem:[%s1 + $0x10] sm:$0xff]
    %v73 = vld [vmem:[%s1 + $0x18] sm:$0xff]
    %75 = vset.pattern.permute.xlu0 0
    %76 = vperm.xlu0 %75, %v62
    %v77 = vpop.permute.xlu0 %76
    %80 = vset.pattern.permute.xlu0 0
    %81 = vperm.xlu0 %80, %v63
    %v82 = vpop.permute.xlu0 %81
    %85 = vset.pattern.permute.xlu0 0
    %86 = vperm.xlu0 %85, %v64
    %v87 = vpop.permute.xlu0 %86
    %90 = vset.pattern.permute.xlu0 0
    %91 = vperm.xlu0 %90, %v65
    %v92 = vpop.permute.xlu0 %91
    %vm94 = vcmask 261120
    %v96 = vsel %vm94, %v54, 0
    %v99 = vsel %vm94, %v55, 0
    %v102 = vsel %vm94, %v56, 0
    %v105 = vsel %vm94, %v57, 0
    %107 = vmatprep.subr.mxu0 0.0
    %108 = vmatpush1.msra.mxu0 0.0
    %109 = vmatprep.subr.mxu0 0.0
    %110 = vmatpush1.msra.mxu0 0.0
    %111 = vmatprep.subr.mxu0 0.0
    %112 = vmatpush1.msra.mxu0 0.0
    %113 = vmatprep.subr.mxu0 0.0
    %114 = vmatpush1.msra.mxu0 0.0
    %115 = vmatprep.subr.mxu0 0.0
    %116 = vmatpush1.msra.mxu0 0.0
    %117 = vmatprep.subr.mxu0 0.0
    %118 = vmatpush1.msra.mxu0 0.0
    %119 = vmatprep.subr.mxu0 0.0
    %120 = vmatpush1.msra.mxu0 0.0
    %121 = vmatprep.subr.mxu0 0.0
    %122 = vmatpush1.msra.mxu0 0.0
    %123 = vmatprep.subr.mxu0 0.0
    %124 = vmatpush1.msra.mxu0 0.0
    %125 = vmatprep.subr.mxu0 0.0
    %126 = vmatpush1.msra.mxu0 0.0
    %127 = vmatprep.subr.mxu0 0.0
    %128 = vmatpush1.msra.mxu0 0.0
    %129 = vmatprep.subr.mxu0 0.0
    %130 = vmatpush1.msra.mxu0 0.0
    %131 = vmatprep.subr.mxu0 0.0
    %132 = vmatpush1.msra.mxu0 %v73
    %133 = vmatprep.subr.mxu0 0.0
    %134 = vmatpush1.msra.mxu0 %v72
    %135 = vmatprep.subr.mxu0 0.0
    %136 = vmatpush1.msra.mxu0 %v71
    %137 = vmatprep.subr.mxu0 0.0
    %138 = vmatpush1.msra.mxu0 %v70
    %139 = vmatprep.subr.mxu0 0.0
    %140 = vmatpush2.msra.mxu0 0.0
    %141 = vmatprep.subr.mxu0 0.0
    %142 = vmatpush2.msra.mxu0 0.0
    %143 = vmatprep.subr.mxu0 0.0
    %144 = vmatpush2.msra.mxu0 0.0
    %145 = vmatprep.subr.mxu0 0.0
    %146 = vmatpush2.msra.mxu0 0.0
    %147 = vmatprep.subr.mxu0 0.0
    %148 = vmatpush2.msra.mxu0 0.0
    %149 = vmatprep.subr.mxu0 0.0
    %150 = vmatpush2.msra.mxu0 0.0
    %151 = vmatprep.subr.mxu0 0.0
    %152 = vmatpush2.msra.mxu0 0.0
    %153 = vmatprep.subr.mxu0 0.0
    %154 = vmatpush2.msra.mxu0 0.0
    %155 = vmatprep.subr.mxu0 0.0
    %156 = vmatpush2.msra.mxu0 0.0
    %157 = vmatprep.subr.mxu0 0.0
    %158 = vmatpush2.msra.mxu0 0.0
    %159 = vmatprep.subr.mxu0 0.0
    %160 = vmatpush2.msra.mxu0 0.0
    %161 = vmatprep.subr.mxu0 0.0
    %162 = vmatpush2.msra.mxu0 0.0
    %163 = vmatprep.subr.mxu0 0.0
    %164 = vmatpush2.msra.mxu0 0.0
    %165 = vmatprep.subr.mxu0 0.0
    %166 = vmatpush2.msra.mxu0 0.0
    %167 = vmatprep.subr.mxu0 0.0
    %168 = vmatpush2.msra.mxu0 0.0
    %169 = vmatprep.subr.mxu0 0.0
    %170 = vmatpush2.msra.mxu0 0.0
    %171 = vmatprep.mubr.f32.mxu0 0.0
    %172 = vmatmul.mubr.f32.gmra.mxu0 %v96
    %v173 = vpop.f32.mrf.mxu0
    %v174 = vadd.f32 %v77, %v173
    %v175 = vpop.f32.mrf.mxu0
    %176 = vmatprep.mubr.f32.mxu0 0.0
    %177 = vmatmul.mubr.f32.gmra.mxu0 %v99
    %v178 = vpop.f32.mrf.mxu0
    %v179 = vadd.f32 %v82, %v178
    %v180 = vpop.f32.mrf.mxu0
    %181 = vmatprep.mubr.f32.mxu0 0.0
    %182 = vmatmul.mubr.f32.gmra.mxu0 %v102
    %v183 = vpop.f32.mrf.mxu0
    %v184 = vadd.f32 %v87, %v183
    %v185 = vpop.f32.mrf.mxu0
    %186 = vmatprep.mubr.f32.mxu0 0.0
    %187 = vmatmul.mubr.f32.gmra.mxu0 %v105
    %v188 = vpop.f32.mrf.mxu0
    %v189 = vadd.f32 %v92, %v188
    %v190 = vpop.f32.mrf.mxu0
    %191 = vdwg.mxu0
    %v192 = vtanh.pop %v174
    %v193 = vtanh.pop %v179
    %v194 = vtanh.pop %v184
    %v195 = vtanh.pop %v189
    %197 = vset.pattern.permute.xlu0 0
    %198 = vperm.xlu0 %197, %v66
    %v199 = vpop.permute.xlu0 %198
    %202 = vset.pattern.permute.xlu0 0
    %203 = vperm.xlu0 %202, %v67
    %v204 = vpop.permute.xlu0 %203
    %207 = vset.pattern.permute.xlu0 0
    %208 = vperm.xlu0 %207, %v68
    %v209 = vpop.permute.xlu0 %208
    %212 = vset.pattern.permute.xlu0 0
    %213 = vperm.xlu0 %212, %v69
    %v214 = vpop.permute.xlu0 %213
    %v217 = vsel %vm94, %v58, 0
    %v220 = vsel %vm94, %v59, 0
    %v223 = vsel %vm94, %v60, 0
    %v226 = vsel %vm94, %v61, 0
    %228 = vmatprep.subr.mxu0 0.0
    %229 = vmatpush1.msra.mxu0 0.0
    %230 = vmatprep.subr.mxu0 0.0
    %231 = vmatpush1.msra.mxu0 0.0
    %232 = vmatprep.subr.mxu0 0.0
    %233 = vmatpush1.msra.mxu0 0.0
    %234 = vmatprep.subr.mxu0 0.0
    %235 = vmatpush1.msra.mxu0 0.0
    %236 = vmatprep.subr.mxu0 0.0
    %237 = vmatpush1.msra.mxu0 0.0
    %238 = vmatprep.subr.mxu0 0.0
    %239 = vmatpush1.msra.mxu0 0.0
    %240 = vmatprep.subr.mxu0 0.0
    %241 = vmatpush1.msra.mxu0 0.0
    %242 = vmatprep.subr.mxu0 0.0
    %243 = vmatpush1.msra.mxu0 0.0
    %244 = vmatprep.subr.mxu0 0.0
    %245 = vmatpush1.msra.mxu0 0.0
    %246 = vmatprep.subr.mxu0 0.0
    %247 = vmatpush1.msra.mxu0 0.0
    %248 = vmatprep.subr.mxu0 0.0
    %249 = vmatpush1.msra.mxu0 0.0
    %250 = vmatprep.subr.mxu0 0.0
    %251 = vmatpush1.msra.mxu0 0.0
    %252 = vmatprep.subr.mxu0 0.0
    %253 = vmatpush1.msra.mxu0 %v195
    %254 = vmatprep.subr.mxu0 0.0
    %255 = vmatpush1.msra.mxu0 %v194
    %256 = vmatprep.subr.mxu0 0.0
    %257 = vmatpush1.msra.mxu0 %v193
    %258 = vmatprep.subr.mxu0 0.0
    %259 = vmatpush1.msra.mxu0 %v192
    %260 = vmatprep.subr.mxu0 0.0
    %261 = vmatpush2.msra.mxu0 0.0
    %262 = vmatprep.subr.mxu0 0.0
    %263 = vmatpush2.msra.mxu0 0.0
    %264 = vmatprep.subr.mxu0 0.0
    %265 = vmatpush2.msra.mxu0 0.0
    %266 = vmatprep.subr.mxu0 0.0
    %267 = vmatpush2.msra.mxu0 0.0
    %268 = vmatprep.subr.mxu0 0.0
    %269 = vmatpush2.msra.mxu0 0.0
    %270 = vmatprep.subr.mxu0 0.0
    %271 = vmatpush2.msra.mxu0 0.0
    %272 = vmatprep.subr.mxu0 0.0
    %273 = vmatpush2.msra.mxu0 0.0
    %274 = vmatprep.subr.mxu0 0.0
    %275 = vmatpush2.msra.mxu0 0.0
    %276 = vmatprep.subr.mxu0 0.0
    %277 = vmatpush2.msra.mxu0 0.0
    %278 = vmatprep.subr.mxu0 0.0
    %279 = vmatpush2.msra.mxu0 0.0
    %280 = vmatprep.subr.mxu0 0.0
    %281 = vmatpush2.msra.mxu0 0.0
    %282 = vmatprep.subr.mxu0 0.0
    %283 = vmatpush2.msra.mxu0 0.0
    %284 = vmatprep.subr.mxu0 0.0
    %285 = vmatpush2.msra.mxu0 0.0
    %286 = vmatprep.subr.mxu0 0.0
    %287 = vmatpush2.msra.mxu0 0.0
    %288 = vmatprep.subr.mxu0 0.0
    %289 = vmatpush2.msra.mxu0 0.0
    %290 = vmatprep.subr.mxu0 0.0
    %291 = vmatpush2.msra.mxu0 0.0
    %292 = vmatprep.mubr.f32.mxu0 0.0
    %293 = vmatmul.mubr.f32.gmra.mxu0 %v217
    %v294 = vpop.f32.mrf.mxu0
    %v295 = vadd.f32 %v199, %v294
    %v296 = vpop.f32.mrf.mxu0
    %297 = vmatprep.mubr.f32.mxu0 0.0
    %298 = vmatmul.mubr.f32.gmra.mxu0 %v220
    %v299 = vpop.f32.mrf.mxu0
    %v300 = vadd.f32 %v204, %v299
    %v301 = vpop.f32.mrf.mxu0
    %302 = vmatprep.mubr.f32.mxu0 0.0
    %303 = vmatmul.mubr.f32.gmra.mxu0 %v223
    %v304 = vpop.f32.mrf.mxu0
    %v305 = vadd.f32 %v209, %v304
    %v306 = vpop.f32.mrf.mxu0
    %307 = vmatprep.mubr.f32.mxu0 0.0
    %308 = vmatmul.mubr.f32.gmra.mxu0 %v226
    %v309 = vpop.f32.mrf.mxu0
    %v310 = vadd.f32 %v214, %v309
    %v311 = vpop.f32.mrf.mxu0
    %312 = vdwg.mxu0
    %s313 = smul.f32 %s53, 0.5
    %v314 = vstv %s313
    %v315 = vmul.f32 %v314, %v295
    %v316 = vmul.f32 %v314, %v300
    %v317 = vmul.f32 %v314, %v305
    %v318 = vmul.f32 %v314, %v310
    %v319 = vadd.f32 %v70, %v315
    %v320 = vadd.f32 %v71, %v316
    %v321 = vadd.f32 %v72, %v317
    %v322 = vadd.f32 %v73, %v318
    %323 = vmatprep.subr.mxu0 0.0
    %324 = vmatpush1.msra.mxu0 0.0
    %325 = vmatprep.subr.mxu0 0.0
    %326 = vmatpush1.msra.mxu0 0.0
    %327 = vmatprep.subr.mxu0 0.0
    %328 = vmatpush1.msra.mxu0 0.0
    %329 = vmatprep.subr.mxu0 0.0
    %330 = vmatpush1.msra.mxu0 0.0
    %331 = vmatprep.subr.mxu0 0.0
    %332 = vmatpush1.msra.mxu0 0.0
    %333 = vmatprep.subr.mxu0 0.0
    %334 = vmatpush1.msra.mxu0 0.0
    %335 = vmatprep.subr.mxu0 0.0
    %336 = vmatpush1.msra.mxu0 0.0
    %337 = vmatprep.subr.mxu0 0.0
    %338 = vmatpush1.msra.mxu0 0.0
    %339 = vmatprep.subr.mxu0 0.0
    %340 = vmatpush1.msra.mxu0 0.0
    %341 = vmatprep.subr.mxu0 0.0
    %342 = vmatpush1.msra.mxu0 0.0
    %343 = vmatprep.subr.mxu0 0.0
    %344 = vmatpush1.msra.mxu0 0.0
    %345 = vmatprep.subr.mxu0 0.0
    %346 = vmatpush1.msra.mxu0 0.0
    %347 = vmatprep.subr.mxu0 0.0
    %348 = vmatpush1.msra.mxu0 %v322
    %349 = vmatprep.subr.mxu0 0.0
    %350 = vmatpush1.msra.mxu0 %v321
    %351 = vmatprep.subr.mxu0 0.0
    %352 = vmatpush1.msra.mxu0 %v320
    %353 = vmatprep.subr.mxu0 0.0
    %354 = vmatpush1.msra.mxu0 %v319
    %355 = vmatprep.subr.mxu0 0.0
    %356 = vmatpush2.msra.mxu0 0.0
    %357 = vmatprep.subr.mxu0 0.0
    %358 = vmatpush2.msra.mxu0 0.0
    %359 = vmatprep.subr.mxu0 0.0
    %360 = vmatpush2.msra.mxu0 0.0
    %361 = vmatprep.subr.mxu0 0.0
    %362 = vmatpush2.msra.mxu0 0.0
    %363 = vmatprep.subr.mxu0 0.0
    %364 = vmatpush2.msra.mxu0 0.0
    %365 = vmatprep.subr.mxu0 0.0
    %366 = vmatpush2.msra.mxu0 0.0
    %367 = vmatprep.subr.mxu0 0.0
    %368 = vmatpush2.msra.mxu0 0.0
    %369 = vmatprep.subr.mxu0 0.0
    %370 = vmatpush2.msra.mxu0 0.0
    %371 = vmatprep.subr.mxu0 0.0
    %372 = vmatpush2.msra.mxu0 0.0
    %373 = vmatprep.subr.mxu0 0.0
    %374 = vmatpush2.msra.mxu0 0.0
    %375 = vmatprep.subr.mxu0 0.0
    %376 = vmatpush2.msra.mxu0 0.0
    %377 = vmatprep.subr.mxu0 0.0
    %378 = vmatpush2.msra.mxu0 0.0
    %379 = vmatprep.subr.mxu0 0.0
    %380 = vmatpush2.msra.mxu0 0.0
    %381 = vmatprep.subr.mxu0 0.0
    %382 = vmatpush2.msra.mxu0 0.0
    %383 = vmatprep.subr.mxu0 0.0
    %384 = vmatpush2.msra.mxu0 0.0
    %385 = vmatprep.subr.mxu0 0.0
    %386 = vmatpush2.msra.mxu0 0.0
    %387 = vmatprep.mubr.f32.mxu0 0.0
    %388 = vmatmul.mubr.f32.gmra.mxu0 %v96
    %v389 = vpop.f32.mrf.mxu0
    %v390 = vadd.f32 %v77, %v389
    %v391 = vpop.f32.mrf.mxu0
    %392 = vmatprep.mubr.f32.mxu0 0.0
    %393 = vmatmul.mubr.f32.gmra.mxu0 %v99
    %v394 = vpop.f32.mrf.mxu0
    %v395 = vadd.f32 %v82, %v394
    %v396 = vpop.f32.mrf.mxu0
    %397 = vmatprep.mubr.f32.mxu0 0.0
    %398 = vmatmul.mubr.f32.gmra.mxu0 %v102
    %v399 = vpop.f32.mrf.mxu0
    %v400 = vadd.f32 %v87, %v399
    %v401 = vpop.f32.mrf.mxu0
    %402 = vmatprep.mubr.f32.mxu0 0.0
    %403 = vmatmul.mubr.f32.gmra.mxu0 %v105
    %v404 = vpop.f32.mrf.mxu0
    %v405 = vadd.f32 %v92, %v404
    %v406 = vpop.f32.mrf.mxu0
    %407 = vdwg.mxu0
    %v408 = vtanh.pop %v390
    %v409 = vtanh.pop %v395
    %v410 = vtanh.pop %v400
    %v411 = vtanh.pop %v405
    %412 = vmatprep.subr.mxu0 0.0
    %413 = vmatpush1.msra.mxu0 0.0
    %414 = vmatprep.subr.mxu0 0.0
    %415 = vmatpush1.msra.mxu0 0.0
    %416 = vmatprep.subr.mxu0 0.0
    %417 = vmatpush1.msra.mxu0 0.0
    %418 = vmatprep.subr.mxu0 0.0
    %419 = vmatpush1.msra.mxu0 0.0
    %420 = vmatprep.subr.mxu0 0.0
    %421 = vmatpush1.msra.mxu0 0.0
    %422 = vmatprep.subr.mxu0 0.0
    %423 = vmatpush1.msra.mxu0 0.0
    %424 = vmatprep.subr.mxu0 0.0
    %425 = vmatpush1.msra.mxu0 0.0
    %426 = vmatprep.subr.mxu0 0.0
    %427 = vmatpush1.msra.mxu0 0.0
    %428 = vmatprep.subr.mxu0 0.0
    %429 = vmatpush1.msra.mxu0 0.0
    %430 = vmatprep.subr.mxu0 0.0
    %431 = vmatpush1.msra.mxu0 0.0
    %432 = vmatprep.subr.mxu0 0.0
    %433 = vmatpush1.msra.mxu0 0.0
    %434 = vmatprep.subr.mxu0 0.0
    %435 = vmatpush1.msra.mxu0 0.0
    %436 = vmatprep.subr.mxu0 0.0
    %437 = vmatpush1.msra.mxu0 %v411
    %438 = vmatprep.subr.mxu0 0.0
    %439 = vmatpush1.msra.mxu0 %v410
    %440 = vmatprep.subr.mxu0 0.0
    %441 = vmatpush1.msra.mxu0 %v409
    %442 = vmatprep.subr.mxu0 0.0
    %443 = vmatpush1.msra.mxu0 %v408
    %444 = vmatprep.subr.mxu0 0.0
    %445 = vmatpush2.msra.mxu0 0.0
    %446 = vmatprep.subr.mxu0 0.0
    %447 = vmatpush2.msra.mxu0 0.0
    %448 = vmatprep.subr.mxu0 0.0
    %449 = vmatpush2.msra.mxu0 0.0
    %450 = vmatprep.subr.mxu0 0.0
    %451 = vmatpush2.msra.mxu0 0.0
    %452 = vmatprep.subr.mxu0 0.0
    %453 = vmatpush2.msra.mxu0 0.0
    %454 = vmatprep.subr.mxu0 0.0
    %455 = vmatpush2.msra.mxu0 0.0
    %456 = vmatprep.subr.mxu0 0.0
    %457 = vmatpush2.msra.mxu0 0.0
    %458 = vmatprep.subr.mxu0 0.0
    %459 = vmatpush2.msra.mxu0 0.0
    %460 = vmatprep.subr.mxu0 0.0
    %461 = vmatpush2.msra.mxu0 0.0
    %462 = vmatprep.subr.mxu0 0.0
    %463 = vmatpush2.msra.mxu0 0.0
    %464 = vmatprep.subr.mxu0 0.0
    %465 = vmatpush2.msra.mxu0 0.0
    %466 = vmatprep.subr.mxu0 0.0
    %467 = vmatpush2.msra.mxu0 0.0
    %468 = vmatprep.subr.mxu0 0.0
    %469 = vmatpush2.msra.mxu0 0.0
    %470 = vmatprep.subr.mxu0 0.0
    %471 = vmatpush2.msra.mxu0 0.0
    %472 = vmatprep.subr.mxu0 0.0
    %473 = vmatpush2.msra.mxu0 0.0
    %474 = vmatprep.subr.mxu0 0.0
    %475 = vmatpush2.msra.mxu0 0.0
    %476 = vmatprep.mubr.f32.mxu0 0.0
    %477 = vmatmul.mubr.f32.gmra.mxu0 %v217
    %v478 = vpop.f32.mrf.mxu0
    %v479 = vadd.f32 %v199, %v478
    %v480 = vpop.f32.mrf.mxu0
    %481 = vmatprep.mubr.f32.mxu0 0.0
    %482 = vmatmul.mubr.f32.gmra.mxu0 %v220
    %v483 = vpop.f32.mrf.mxu0
    %v484 = vadd.f32 %v204, %v483
    %v485 = vpop.f32.mrf.mxu0
    %486 = vmatprep.mubr.f32.mxu0 0.0
    %487 = vmatmul.mubr.f32.gmra.mxu0 %v223
    %v488 = vpop.f32.mrf.mxu0
    %v489 = vadd.f32 %v209, %v488
    %v490 = vpop.f32.mrf.mxu0
    %491 = vmatprep.mubr.f32.mxu0 0.0
    %492 = vmatmul.mubr.f32.gmra.mxu0 %v226
    %v493 = vpop.f32.mrf.mxu0
    %v494 = vadd.f32 %v214, %v493
    %v495 = vpop.f32.mrf.mxu0
    %496 = vdwg.mxu0
    %v497 = vmul.f32 %v479, 2.0
    %v498 = vmul.f32 %v484, 2.0
    %v499 = vmul.f32 %v489, 2.0
    %v500 = vmul.f32 %v494, 2.0
    %v501 = vadd.f32 %v295, %v497
    %v502 = vadd.f32 %v300, %v498
    %v503 = vadd.f32 %v305, %v499
    %v504 = vadd.f32 %v310, %v500
    %v505 = vmul.f32 %v314, %v479
    %v506 = vmul.f32 %v314, %v484
    %v507 = vmul.f32 %v314, %v489
    %v508 = vmul.f32 %v314, %v494
    %v509 = vadd.f32 %v70, %v505
    %v510 = vadd.f32 %v71, %v506
    %v511 = vadd.f32 %v72, %v507
    %v512 = vadd.f32 %v73, %v508
    %513 = vmatprep.subr.mxu0 0.0
    %514 = vmatpush1.msra.mxu0 0.0
    %515 = vmatprep.subr.mxu0 0.0
    %516 = vmatpush1.msra.mxu0 0.0
    %517 = vmatprep.subr.mxu0 0.0
    %518 = vmatpush1.msra.mxu0 0.0
    %519 = vmatprep.subr.mxu0 0.0
    %520 = vmatpush1.msra.mxu0 0.0
    %521 = vmatprep.subr.mxu0 0.0
    %522 = vmatpush1.msra.mxu0 0.0
    %523 = vmatprep.subr.mxu0 0.0
    %524 = vmatpush1.msra.mxu0 0.0
    %525 = vmatprep.subr.mxu0 0.0
    %526 = vmatpush1.msra.mxu0 0.0
    %527 = vmatprep.subr.mxu0 0.0
    %528 = vmatpush1.msra.mxu0 0.0
    %529 = vmatprep.subr.mxu0 0.0
    %530 = vmatpush1.msra.mxu0 0.0
    %531 = vmatprep.subr.mxu0 0.0
    %532 = vmatpush1.msra.mxu0 0.0
    %533 = vmatprep.subr.mxu0 0.0
    %534 = vmatpush1.msra.mxu0 0.0
    %535 = vmatprep.subr.mxu0 0.0
    %536 = vmatpush1.msra.mxu0 0.0
    %537 = vmatprep.subr.mxu0 0.0
    %538 = vmatpush1.msra.mxu0 %v512
    %539 = vmatprep.subr.mxu0 0.0
    %540 = vmatpush1.msra.mxu0 %v511
    %541 = vmatprep.subr.mxu0 0.0
    %542 = vmatpush1.msra.mxu0 %v510
    %543 = vmatprep.subr.mxu0 0.0
    %544 = vmatpush1.msra.mxu0 %v509
    %545 = vmatprep.subr.mxu0 0.0
    %546 = vmatpush2.msra.mxu0 0.0
    %547 = vmatprep.subr.mxu0 0.0
    %548 = vmatpush2.msra.mxu0 0.0
    %549 = vmatprep.subr.mxu0 0.0
    %550 = vmatpush2.msra.mxu0 0.0
    %551 = vmatprep.subr.mxu0 0.0
    %552 = vmatpush2.msra.mxu0 0.0
    %553 = vmatprep.subr.mxu0 0.0
    %554 = vmatpush2.msra.mxu0 0.0
    %555 = vmatprep.subr.mxu0 0.0
    %556 = vmatpush2.msra.mxu0 0.0
    %557 = vmatprep.subr.mxu0 0.0
    %558 = vmatpush2.msra.mxu0 0.0
    %559 = vmatprep.subr.mxu0 0.0
    %560 = vmatpush2.msra.mxu0 0.0
    %561 = vmatprep.subr.mxu0 0.0
    %562 = vmatpush2.msra.mxu0 0.0
    %563 = vmatprep.subr.mxu0 0.0
    %564 = vmatpush2.msra.mxu0 0.0
    %565 = vmatprep.subr.mxu0 0.0
    %566 = vmatpush2.msra.mxu0 0.0
    %567 = vmatprep.subr.mxu0 0.0
    %568 = vmatpush2.msra.mxu0 0.0
    %569 = vmatprep.subr.mxu0 0.0
    %570 = vmatpush2.msra.mxu0 0.0
    %571 = vmatprep.subr.mxu0 0.0
    %572 = vmatpush2.msra.mxu0 0.0
    %573 = vmatprep.subr.mxu0 0.0
    %574 = vmatpush2.msra.mxu0 0.0
    %575 = vmatprep.subr.mxu0 0.0
    %576 = vmatpush2.msra.mxu0 0.0
    %577 = vmatprep.mubr.f32.mxu0 0.0
    %578 = vmatmul.mubr.f32.gmra.mxu0 %v96
    %v579 = vpop.f32.mrf.mxu0
    %v580 = vadd.f32 %v77, %v579
    %v581 = vpop.f32.mrf.mxu0
    %582 = vmatprep.mubr.f32.mxu0 0.0
    %583 = vmatmul.mubr.f32.gmra.mxu0 %v99
    %v584 = vpop.f32.mrf.mxu0
    %v585 = vadd.f32 %v82, %v584
    %v586 = vpop.f32.mrf.mxu0
    %587 = vmatprep.mubr.f32.mxu0 0.0
    %588 = vmatmul.mubr.f32.gmra.mxu0 %v102
    %v589 = vpop.f32.mrf.mxu0
    %v590 = vadd.f32 %v87, %v589
    %v591 = vpop.f32.mrf.mxu0
    %592 = vmatprep.mubr.f32.mxu0 0.0
    %593 = vmatmul.mubr.f32.gmra.mxu0 %v105
    %v594 = vpop.f32.mrf.mxu0
    %v595 = vadd.f32 %v92, %v594
    %v596 = vpop.f32.mrf.mxu0
    %597 = vdwg.mxu0
    %v598 = vtanh.pop %v580
    %v599 = vtanh.pop %v585
    %v600 = vtanh.pop %v590
    %v601 = vtanh.pop %v595
    %602 = vmatprep.subr.mxu0 0.0
    %603 = vmatpush1.msra.mxu0 0.0
    %604 = vmatprep.subr.mxu0 0.0
    %605 = vmatpush1.msra.mxu0 0.0
    %606 = vmatprep.subr.mxu0 0.0
    %607 = vmatpush1.msra.mxu0 0.0
    %608 = vmatprep.subr.mxu0 0.0
    %609 = vmatpush1.msra.mxu0 0.0
    %610 = vmatprep.subr.mxu0 0.0
    %611 = vmatpush1.msra.mxu0 0.0
    %612 = vmatprep.subr.mxu0 0.0
    %613 = vmatpush1.msra.mxu0 0.0
    %614 = vmatprep.subr.mxu0 0.0
    %615 = vmatpush1.msra.mxu0 0.0
    %616 = vmatprep.subr.mxu0 0.0
    %617 = vmatpush1.msra.mxu0 0.0
    %618 = vmatprep.subr.mxu0 0.0
    %619 = vmatpush1.msra.mxu0 0.0
    %620 = vmatprep.subr.mxu0 0.0
    %621 = vmatpush1.msra.mxu0 0.0
    %622 = vmatprep.subr.mxu0 0.0
    %623 = vmatpush1.msra.mxu0 0.0
    %624 = vmatprep.subr.mxu0 0.0
    %625 = vmatpush1.msra.mxu0 0.0
    %626 = vmatprep.subr.mxu0 0.0
    %627 = vmatpush1.msra.mxu0 %v601
    %628 = vmatprep.subr.mxu0 0.0
    %629 = vmatpush1.msra.mxu0 %v600
    %630 = vmatprep.subr.mxu0 0.0
    %631 = vmatpush1.msra.mxu0 %v599
    %632 = vmatprep.subr.mxu0 0.0
    %633 = vmatpush1.msra.mxu0 %v598
    %634 = vmatprep.subr.mxu0 0.0
    %635 = vmatpush2.msra.mxu0 0.0
    %636 = vmatprep.subr.mxu0 0.0
    %637 = vmatpush2.msra.mxu0 0.0
    %638 = vmatprep.subr.mxu0 0.0
    %639 = vmatpush2.msra.mxu0 0.0
    %640 = vmatprep.subr.mxu0 0.0
    %641 = vmatpush2.msra.mxu0 0.0
    %642 = vmatprep.subr.mxu0 0.0
    %643 = vmatpush2.msra.mxu0 0.0
    %644 = vmatprep.subr.mxu0 0.0
    %645 = vmatpush2.msra.mxu0 0.0
    %646 = vmatprep.subr.mxu0 0.0
    %647 = vmatpush2.msra.mxu0 0.0
    %648 = vmatprep.subr.mxu0 0.0
    %649 = vmatpush2.msra.mxu0 0.0
    %650 = vmatprep.subr.mxu0 0.0
    %651 = vmatpush2.msra.mxu0 0.0
    %652 = vmatprep.subr.mxu0 0.0
    %653 = vmatpush2.msra.mxu0 0.0
    %654 = vmatprep.subr.mxu0 0.0
    %655 = vmatpush2.msra.mxu0 0.0
    %656 = vmatprep.subr.mxu0 0.0
    %657 = vmatpush2.msra.mxu0 0.0
    %658 = vmatprep.subr.mxu0 0.0
    %659 = vmatpush2.msra.mxu0 0.0
    %660 = vmatprep.subr.mxu0 0.0
    %661 = vmatpush2.msra.mxu0 0.0
    %662 = vmatprep.subr.mxu0 0.0
    %663 = vmatpush2.msra.mxu0 0.0
    %664 = vmatprep.subr.mxu0 0.0
    %665 = vmatpush2.msra.mxu0 0.0
    %666 = vmatprep.mubr.f32.mxu0 0.0
    %667 = vmatmul.mubr.f32.gmra.mxu0 %v217
    %v668 = vpop.f32.mrf.mxu0
    %v669 = vadd.f32 %v199, %v668
    %v670 = vpop.f32.mrf.mxu0
    %671 = vmatprep.mubr.f32.mxu0 0.0
    %672 = vmatmul.mubr.f32.gmra.mxu0 %v220
    %v673 = vpop.f32.mrf.mxu0
    %v674 = vadd.f32 %v204, %v673
    %v675 = vpop.f32.mrf.mxu0
    %676 = vmatprep.mubr.f32.mxu0 0.0
    %677 = vmatmul.mubr.f32.gmra.mxu0 %v223
    %v678 = vpop.f32.mrf.mxu0
    %v679 = vadd.f32 %v209, %v678
    %v680 = vpop.f32.mrf.mxu0
    %681 = vmatprep.mubr.f32.mxu0 0.0
    %682 = vmatmul.mubr.f32.gmra.mxu0 %v226
    %v683 = vpop.f32.mrf.mxu0
    %v684 = vadd.f32 %v214, %v683
    %v685 = vpop.f32.mrf.mxu0
    %686 = vdwg.mxu0
    %v687 = vmul.f32 %v669, 2.0
    %v688 = vmul.f32 %v674, 2.0
    %v689 = vmul.f32 %v679, 2.0
    %v690 = vmul.f32 %v684, 2.0
    %v691 = vadd.f32 %v501, %v687
    %v692 = vadd.f32 %v502, %v688
    %v693 = vadd.f32 %v503, %v689
    %v694 = vadd.f32 %v504, %v690
    %v695 = vstv %s53
    %v696 = vmul.f32 %v695, %v669
    %v697 = vmul.f32 %v695, %v674
    %v698 = vmul.f32 %v695, %v679
    %v699 = vmul.f32 %v695, %v684
    %v700 = vadd.f32 %v70, %v696
    %v701 = vadd.f32 %v71, %v697
    %v702 = vadd.f32 %v72, %v698
    %v703 = vadd.f32 %v73, %v699
    %704 = vmatprep.subr.mxu0 0.0
    %705 = vmatpush1.msra.mxu0 0.0
    %706 = vmatprep.subr.mxu0 0.0
    %707 = vmatpush1.msra.mxu0 0.0
    %708 = vmatprep.subr.mxu0 0.0
    %709 = vmatpush1.msra.mxu0 0.0
    %710 = vmatprep.subr.mxu0 0.0
    %711 = vmatpush1.msra.mxu0 0.0
    %712 = vmatprep.subr.mxu0 0.0
    %713 = vmatpush1.msra.mxu0 0.0
    %714 = vmatprep.subr.mxu0 0.0
    %715 = vmatpush1.msra.mxu0 0.0
    %716 = vmatprep.subr.mxu0 0.0
    %717 = vmatpush1.msra.mxu0 0.0
    %718 = vmatprep.subr.mxu0 0.0
    %719 = vmatpush1.msra.mxu0 0.0
    %720 = vmatprep.subr.mxu0 0.0
    %721 = vmatpush1.msra.mxu0 0.0
    %722 = vmatprep.subr.mxu0 0.0
    %723 = vmatpush1.msra.mxu0 0.0
    %724 = vmatprep.subr.mxu0 0.0
    %725 = vmatpush1.msra.mxu0 0.0
    %726 = vmatprep.subr.mxu0 0.0
    %727 = vmatpush1.msra.mxu0 0.0
    %728 = vmatprep.subr.mxu0 0.0
    %729 = vmatpush1.msra.mxu0 %v703
    %730 = vmatprep.subr.mxu0 0.0
    %731 = vmatpush1.msra.mxu0 %v702
    %732 = vmatprep.subr.mxu0 0.0
    %733 = vmatpush1.msra.mxu0 %v701
    %734 = vmatprep.subr.mxu0 0.0
    %735 = vmatpush1.msra.mxu0 %v700
    %736 = vmatprep.subr.mxu0 0.0
    %737 = vmatpush2.msra.mxu0 0.0
    %738 = vmatprep.subr.mxu0 0.0
    %739 = vmatpush2.msra.mxu0 0.0
    %740 = vmatprep.subr.mxu0 0.0
    %741 = vmatpush2.msra.mxu0 0.0
    %742 = vmatprep.subr.mxu0 0.0
    %743 = vmatpush2.msra.mxu0 0.0
    %744 = vmatprep.subr.mxu0 0.0
    %745 = vmatpush2.msra.mxu0 0.0
    %746 = vmatprep.subr.mxu0 0.0
    %747 = vmatpush2.msra.mxu0 0.0
    %748 = vmatprep.subr.mxu0 0.0
    %749 = vmatpush2.msra.mxu0 0.0
    %750 = vmatprep.subr.mxu0 0.0
    %751 = vmatpush2.msra.mxu0 0.0
    %752 = vmatprep.subr.mxu0 0.0
    %753 = vmatpush2.msra.mxu0 0.0
    %754 = vmatprep.subr.mxu0 0.0
    %755 = vmatpush2.msra.mxu0 0.0
    %756 = vmatprep.subr.mxu0 0.0
    %757 = vmatpush2.msra.mxu0 0.0
    %758 = vmatprep.subr.mxu0 0.0
    %759 = vmatpush2.msra.mxu0 0.0
    %760 = vmatprep.subr.mxu0 0.0
    %761 = vmatpush2.msra.mxu0 0.0
    %762 = vmatprep.subr.mxu0 0.0
    %763 = vmatpush2.msra.mxu0 0.0
    %764 = vmatprep.subr.mxu0 0.0
    %765 = vmatpush2.msra.mxu0 0.0
    %766 = vmatprep.subr.mxu0 0.0
    %767 = vmatpush2.msra.mxu0 0.0
    %768 = vmatprep.mubr.f32.mxu0 0.0
    %769 = vmatmul.mubr.f32.gmra.mxu0 %v96
    %v770 = vpop.f32.mrf.mxu0
    %v771 = vadd.f32 %v77, %v770
    %v772 = vpop.f32.mrf.mxu0
    %773 = vmatprep.mubr.f32.mxu0 0.0
    %774 = vmatmul.mubr.f32.gmra.mxu0 %v99
    %v775 = vpop.f32.mrf.mxu0
    %v776 = vadd.f32 %v82, %v775
    %v777 = vpop.f32.mrf.mxu0
    %778 = vmatprep.mubr.f32.mxu0 0.0
    %779 = vmatmul.mubr.f32.gmra.mxu0 %v102
    %v780 = vpop.f32.mrf.mxu0
    %v781 = vadd.f32 %v87, %v780
    %v782 = vpop.f32.mrf.mxu0
    %783 = vmatprep.mubr.f32.mxu0 0.0
    %784 = vmatmul.mubr.f32.gmra.mxu0 %v105
    %v785 = vpop.f32.mrf.mxu0
    %v786 = vadd.f32 %v92, %v785
    %v787 = vpop.f32.mrf.mxu0
    %788 = vdwg.mxu0
    %v789 = vtanh.pop %v771
    %v790 = vtanh.pop %v776
    %v791 = vtanh.pop %v781
    %v792 = vtanh.pop %v786
    %793 = vmatprep.subr.mxu0 0.0
    %794 = vmatpush1.msra.mxu0 0.0
    %795 = vmatprep.subr.mxu0 0.0
    %796 = vmatpush1.msra.mxu0 0.0
    %797 = vmatprep.subr.mxu0 0.0
    %798 = vmatpush1.msra.mxu0 0.0
    %799 = vmatprep.subr.mxu0 0.0
    %800 = vmatpush1.msra.mxu0 0.0
    %801 = vmatprep.subr.mxu0 0.0
    %802 = vmatpush1.msra.mxu0 0.0
    %803 = vmatprep.subr.mxu0 0.0
    %804 = vmatpush1.msra.mxu0 0.0
    %805 = vmatprep.subr.mxu0 0.0
    %806 = vmatpush1.msra.mxu0 0.0
    %807 = vmatprep.subr.mxu0 0.0
    %808 = vmatpush1.msra.mxu0 0.0
    %809 = vmatprep.subr.mxu0 0.0
    %810 = vmatpush1.msra.mxu0 0.0
    %811 = vmatprep.subr.mxu0 0.0
    %812 = vmatpush1.msra.mxu0 0.0
    %813 = vmatprep.subr.mxu0 0.0
    %814 = vmatpush1.msra.mxu0 0.0
    %815 = vmatprep.subr.mxu0 0.0
    %816 = vmatpush1.msra.mxu0 0.0
    %817 = vmatprep.subr.mxu0 0.0
    %818 = vmatpush1.msra.mxu0 %v792
    %819 = vmatprep.subr.mxu0 0.0
    %820 = vmatpush1.msra.mxu0 %v791
    %821 = vmatprep.subr.mxu0 0.0
    %822 = vmatpush1.msra.mxu0 %v790
    %823 = vmatprep.subr.mxu0 0.0
    %824 = vmatpush1.msra.mxu0 %v789
    %825 = vmatprep.subr.mxu0 0.0
    %826 = vmatpush2.msra.mxu0 0.0
    %827 = vmatprep.subr.mxu0 0.0
    %828 = vmatpush2.msra.mxu0 0.0
    %829 = vmatprep.subr.mxu0 0.0
    %830 = vmatpush2.msra.mxu0 0.0
    %831 = vmatprep.subr.mxu0 0.0
    %832 = vmatpush2.msra.mxu0 0.0
    %833 = vmatprep.subr.mxu0 0.0
    %834 = vmatpush2.msra.mxu0 0.0
    %835 = vmatprep.subr.mxu0 0.0
    %836 = vmatpush2.msra.mxu0 0.0
    %837 = vmatprep.subr.mxu0 0.0
    %838 = vmatpush2.msra.mxu0 0.0
    %839 = vmatprep.subr.mxu0 0.0
    %840 = vmatpush2.msra.mxu0 0.0
    %841 = vmatprep.subr.mxu0 0.0
    %842 = vmatpush2.msra.mxu0 0.0
    %843 = vmatprep.subr.mxu0 0.0
    %844 = vmatpush2.msra.mxu0 0.0
    %845 = vmatprep.subr.mxu0 0.0
    %846 = vmatpush2.msra.mxu0 0.0
    %847 = vmatprep.subr.mxu0 0.0
    %848 = vmatpush2.msra.mxu0 0.0
    %849 = vmatprep.subr.mxu0 0.0
    %850 = vmatpush2.msra.mxu0 0.0
    %851 = vmatprep.subr.mxu0 0.0
    %852 = vmatpush2.msra.mxu0 0.0
    %853 = vmatprep.subr.mxu0 0.0
    %854 = vmatpush2.msra.mxu0 0.0
    %855 = vmatprep.subr.mxu0 0.0
    %856 = vmatpush2.msra.mxu0 0.0
    %857 = vmatprep.mubr.f32.mxu0 0.0
    %858 = vmatmul.mubr.f32.gmra.mxu0 %v217
    %v859 = vpop.f32.mrf.mxu0
    %v860 = vadd.f32 %v199, %v859
    %v861 = vpop.f32.mrf.mxu0
    %862 = vmatprep.mubr.f32.mxu0 0.0
    %863 = vmatmul.mubr.f32.gmra.mxu0 %v220
    %v864 = vpop.f32.mrf.mxu0
    %v865 = vadd.f32 %v204, %v864
    %v866 = vpop.f32.mrf.mxu0
    %867 = vmatprep.mubr.f32.mxu0 0.0
    %868 = vmatmul.mubr.f32.gmra.mxu0 %v223
    %v869 = vpop.f32.mrf.mxu0
    %v870 = vadd.f32 %v209, %v869
    %v871 = vpop.f32.mrf.mxu0
    %872 = vmatprep.mubr.f32.mxu0 0.0
    %873 = vmatmul.mubr.f32.gmra.mxu0 %v226
    %v874 = vpop.f32.mrf.mxu0
    %v875 = vadd.f32 %v214, %v874
    %v876 = vpop.f32.mrf.mxu0
    %877 = vdwg.mxu0
    %v878 = vrcp.pop 6.0
    %s879 = vtos %v878
    %s880 = smul.f32 %s53, %s879
    %v881 = vadd.f32 %v691, %v860
    %v882 = vadd.f32 %v692, %v865
    %v883 = vadd.f32 %v693, %v870
    %v884 = vadd.f32 %v694, %v875
    %v885 = vstv %s880
    %v886 = vmul.f32 %v885, %v881
    %v887 = vmul.f32 %v885, %v882
    %v888 = vmul.f32 %v885, %v883
    %v889 = vmul.f32 %v885, %v884
    %v890 = vadd.f32 %v70, %v886
    %v891 = vadd.f32 %v71, %v887
    %v892 = vadd.f32 %v72, %v888
    %v893 = vadd.f32 %v73, %v889
    %894 = vst [vmem:[#allocation7] sm:$0xff] %v890
    %895 = vst [vmem:[#allocation7 + $0x8] sm:$0xff] %v891
    %896 = vst [vmem:[#allocation7 + $0x10] sm:$0xff] %v892
    %897 = vst [vmem:[#allocation7 + $0x18] sm:$0xff] %v893
    // Predicated region
    $region34: #{tpu_custom_call.1} parent=1 // pred_check
      _
    $region35: #{tpu_custom_call.1} parent=1 // pred_check_branch
      %899 = sbr.rel (0) target = $region37
    $region36: #{tpu_custom_call.1} parent=1 // pred_region
      %s901 = ssub.s32 512, 512
      %902 = vsyncadd [#allocation4], %s901
      %s903 = sshll.u32 [#allocation7], 4
      %s904 = int_to_ptr.vmem [resolvable:$true] %s903
      %909 = dma.vmem_to_hbm [thread:$0]  %s904, 512, %s6, [#allocation4], 128, 128, 8
    $region37: #{tpu_custom_call.1} parent=1 // pred_fallthru
      _
    // Predicated region
    $region38: #{tpu_custom_call.1} parent=1 // pred_check
      _
    $region39: #{tpu_custom_call.1} parent=1 // pred_check_branch
      %911 = sbr.rel (0) target = $region41
    $region40: #{tpu_custom_call.1} parent=1 // pred_region
      %912 = dma.done [#allocation4], 512
    $region41: #{tpu_custom_call.1} parent=1 // pred_fallthru
      _
    %913 = vsyncpa [#allocation3], 1
    %914 = vsyncpa [#allocation4], 1
    %915 = vsyncpa [#allocation5], 1

</llo_original>
